<compile_context>
chip_gen: v7x
topology: tpu7x:2x2x1
jax: 0.10.0
libtpu: 0.0.40
codegen_flags: <defaults>
</compile_context>

<pallas_src>
import functools

import numpy as np
import jax
import jax.numpy as jnp
from jax.experimental import pallas as pl
from jax.experimental.pallas import tpu as pltpu

PYRAMIDS = (1, 2, 3, 6)
_LANE = 128
_SUBLANE = 8


# ---------------------------------------------------------------------------
# Generation-aware VMEM budgets (v5e/v6e: 128 MiB physical, v7x: 64 MiB/TC).
# ---------------------------------------------------------------------------
def _vmem_budgets():
    phys = 0
    try:
        phys = int(pltpu.get_tpu_info().vmem_capacity_bytes)
    except Exception:
        phys = 0
    if phys < (16 << 20):            # query failed / implausible -> v7x-safe
        phys = 64 << 20
    limit = (phys * 3) // 4          # 48 MiB on v7x, 96 MiB on v5e/v6e
    budget = (limit * 7) // 8        # headroom for Mosaic internal scratch
    return limit, budget


# ---------------------------------------------------------------------------
# Host-side (numpy) construction of the per-branch linear operators.
# ---------------------------------------------------------------------------
def _adaptive_pool_matrix(out_size: int, in_size: int) -> np.ndarray:
    """P[i, j] such that pooled = P @ x reproduces F.adaptive_avg_pool1d."""
    P = np.zeros((out_size, in_size), dtype=np.float64)
    for i in range(out_size):
        start = (i * in_size) // out_size
        end = -((-(i + 1) * in_size) // out_size)          # ceil((i+1)*in/out)
        P[i, start:end] = 1.0 / (end - start)
    return P


def _bilinear_upsample_matrix(out_size: int, in_size: int) -> np.ndarray:
    """U[j, i] such that up = U @ x reproduces bilinear, align_corners=True."""
    U = np.zeros((out_size, in_size), dtype=np.float64)
    for j in range(out_size):
        if in_size == 1 or out_size == 1:
            src = 0.0
        else:
            src = j * (in_size - 1) / (out_size - 1)
        i0 = min(int(np.floor(src)), in_size - 1)
        i1 = min(i0 + 1, in_size - 1)
        frac = src - i0
        U[j, i0] += 1.0 - frac
        U[j, i1] += frac
    return U


@functools.lru_cache(maxsize=None)
def build_lowrank_operators(H, W, pyramids, hw_pad, r_pad):
    """Pt = P_all^T (hw_pad, r_pad) and Ut = U_all^T (r_pad, hw_pad), padded
    with zeros so padded lanes/ranks contribute nothing."""
    HW = H * W
    R = sum(b * b for b in pyramids)
    assert R <= r_pad and HW <= hw_pad
    pt = np.zeros((hw_pad, r_pad), dtype=np.float32)
    ut = np.zeros((r_pad, hw_pad), dtype=np.float32)
    off = 0
    for b in pyramids:
        Ph = _adaptive_pool_matrix(b, H)
        Pw = _adaptive_pool_matrix(b, W)
        Uh = _bilinear_upsample_matrix(H, b)
        Uw = _bilinear_upsample_matrix(W, b)
        pt[:HW, off:off + b * b] = np.kron(Ph, Pw).T       # (HW, b^2)
        ut[off:off + b * b, :HW] = np.kron(Uh, Uw).T       # (b^2, HW)
        off += b * b
    return jnp.asarray(pt), jnp.asarray(ut)


@functools.lru_cache(maxsize=None)
def build_separable_operators(H, W, pyramids):
    """Stacked (NB, H, H) row operators and (NB, W, W) pre-transposed col ops."""
    a_h, a_w_t = [], []
    for b in pyramids:
        Ah = _bilinear_upsample_matrix(H, b) @ _adaptive_pool_matrix(b, H)
        Aw = _bilinear_upsample_matrix(W, b) @ _adaptive_pool_matrix(b, W)
        a_h.append(Ah)
        a_w_t.append(Aw.T)
    return (jnp.asarray(np.stack(a_h).astype(np.float32)),
            jnp.asarray(np.stack(a_w_t).astype(np.float32)))


# ---------------------------------------------------------------------------
# Tiling helpers.
# ---------------------------------------------------------------------------
def _round_up(x: int, m: int) -> int:
    return ((x + m - 1) // m) * m


def _cdiv(a: int, b: int) -> int:
    return -(-a // b)


def _choose_tm(M, per_row_bytes, resident_bytes, budget, tm_max=512):
    """Largest row-tile (multiple of 8, <= tm_max) whose tiles fit VMEM."""
    tm = min(tm_max, _round_up(M, _SUBLANE))
    while tm > _SUBLANE and resident_bytes + tm * per_row_bytes > budget:
        tm = _round_up(max(tm // 2, _SUBLANE), _SUBLANE)
    # Megacore (v7x): make sure the "parallel" grid axis has >= 2 steps when M
    # is large enough to split into two >=128-row halves.
    if M >= 2 * _LANE and _cdiv(M, tm) < 2:
        tm = max(_LANE, _round_up(_cdiv(M, 2), _SUBLANE))
    return tm


# ---------------------------------------------------------------------------
# Pallas kernels.
# ---------------------------------------------------------------------------
def ppm_lowrank_kernel(x_ref, pt_ref, ut_ref, o_ref):
    # x_ref: (TM, HWp) lane-dense block; pt_ref: (HWp, Rp) = P_all^T;
    # ut_ref: (Rp, HWp) = U_all^T.  Identity handled exactly via the add.
    x = x_ref[...].astype(jnp.float32)
    pooled = jnp.dot(x, pt_ref[...], preferred_element_type=jnp.float32)
    up = jnp.dot(pooled, ut_ref[...], preferred_element_type=jnp.float32)
    o_ref[...] = (x + up).astype(o_ref.dtype)


def ppm_separable_kernel(x_ref, ah_ref, awt_ref, o_ref):
    # Fallback for extreme H*W only (there H, W >~ 300, so these matmuls are
    # MXU-sized and the W lane dim is dense).  x_ref: (TM, H, W);
    # ah_ref: (NB, H, H); awt_ref: (NB, W, W) (pre-transposed).
    nb = ah_ref.shape[0]
    tm = x_ref.shape[0]

    @pl.loop(0, tm)
    def _(i):
        xm = x_ref[i].astype(jnp.float32)                  # (H, W)
        acc = xm
        for b in range(nb):                                # static unroll
            t = jnp.dot(ah_ref[b], xm, preferred_element_type=jnp.float32)
            acc = acc + jnp.dot(t, awt_ref[b],
                                preferred_element_type=jnp.float32)
        o_ref[i] = acc.astype(o_ref.dtype)


# ---------------------------------------------------------------------------
# Wrapper.
# ---------------------------------------------------------------------------
def pyramid_pooling_module(x: jax.Array, pyramids=PYRAMIDS,
                           force_path: str | None = None,
                           tm_max: int = 512) -> jax.Array:
    """x: (N, C, H, W) -> (N, C, H, W), same semantics as the PyTorch module."""
    N, C, H, W = x.shape
    M = N * C
    HW = H * W
    pyramids = tuple(int(b) for b in pyramids)
    nb = len(pyramids)
    orig_dtype = x.dtype
    itemsize = 4                                           # f32 compute in VMEM

    vmem_limit, vmem_budget = _vmem_budgets()
    cparams = dict(dimension_semantics=("parallel",),
                   vmem_limit_bytes=vmem_limit)

    hw_pad = _round_up(HW, _LANE)
    r_pad = _round_up(sum(b * b for b in pyramids), _LANE)   # 50 -> 128
    lowrank_op_bytes = 2 * hw_pad * r_pad * itemsize         # Pt + Ut, 1-buffered
    per_row_lr = 2 * 2 * hw_pad * itemsize                   # x + out, 2-buffered

    if force_path is None:
        # Gate assuming the retry path (double-buffered operators) and the
        # smallest legal tile, so every attempt below is guaranteed to fit.
        use_lowrank = (2 * lowrank_op_bytes
                       + _SUBLANE * per_row_lr) <= vmem_budget
    else:
        use_lowrank = force_path == "lowrank"

    if use_lowrank:
        pt, ut = build_lowrank_operators(H, W, pyramids, hw_pad, r_pad)
        x_flat = x.reshape(M, HW)                          # free contiguous reshape
        if hw_pad != HW:
            # Only when HW is not already a multiple of 128: lane-dense stores.
            x_flat = jnp.pad(x_flat, ((0, 0), (0, hw_pad - HW)))

        def run(single_buffer_ops: bool):
            resident = (lowrank_op_bytes if single_buffer_ops
                        else 2 * lowrank_op_bytes)
            tm = _choose_tm(M, per_row_lr, resident, vmem_budget, tm_max)
            grid_m = _cdiv(M, tm)
            op_kw = ({"pipeline_mode": pl.Buffered(1)}
                     if single_buffer_ops else {})
            cost = pl.CostEstimate(
                flops=4 * M * hw_pad * r_pad + M * hw_pad,
                transcendentals=0,
                bytes_accessed=(2 * M * hw_pad + 2 * hw_pad * r_pad) * itemsize)
            return pl.pallas_call(
                ppm_lowrank_kernel,
                out_shape=jax.ShapeDtypeStruct((M, hw_pad), orig_dtype),
                grid_spec=pltpu.PrefetchScalarGridSpec(
                    num_scalar_prefetch=0,
                    grid=(grid_m,),
                    in_specs=[
                        pl.BlockSpec((tm, hw_pad), lambda m: (m, 0)),
                        pl.BlockSpec((hw_pad, r_pad), lambda m: (0, 0), **op_kw),
                        pl.BlockSpec((r_pad, hw_pad), lambda m: (0, 0), **op_kw),
                    ],
                    out_specs=pl.BlockSpec((tm, hw_pad), lambda m: (m, 0)),
                ),
                compiler_params=pltpu.CompilerParams(**cparams),
                cost_estimate=cost,
            )(x_flat, pt, ut)

        try:
            out = run(single_buffer_ops=True)
        except Exception:
            # Safety net in case Buffered(1) is rejected by this jax version.
            out = run(single_buffer_ops=False)

        if hw_pad != HW:
            out = out[:, :HW]
        out = out.reshape(N, C, H, W)
    else:
        # Extreme-H*W fallback: separable per-map matmuls, TM maps per step.
        a_h, a_w_t = build_separable_operators(H, W, pyramids)
        op_bytes = 2 * nb * (H * H + W * W) * itemsize     # double-buffered
        per_row_sep = 2 * 2 * HW * itemsize
        tm = _choose_tm(M, per_row_sep, op_bytes, vmem_budget, tm_max)
        grid_m = _cdiv(M, tm)
        x_maps = x.reshape(M, H, W)
        cost = pl.CostEstimate(
            flops=2 * M * nb * HW * (H + W),
            transcendentals=0,
            bytes_accessed=(2 * M * HW + nb * (H * H + W * W)) * itemsize)
        out = pl.pallas_call(
            ppm_separable_kernel,
            out_shape=jax.ShapeDtypeStruct((M, H, W), orig_dtype),
            grid_spec=pltpu.PrefetchScalarGridSpec(
                num_scalar_prefetch=0,
                grid=(grid_m,),
                in_specs=[
                    pl.BlockSpec((tm, H, W), lambda m: (m, 0, 0)),
                    pl.BlockSpec((nb, H, H), lambda m: (0, 0, 0)),
                    pl.BlockSpec((nb, W, W), lambda m: (0, 0, 0)),
                ],
                out_specs=pl.BlockSpec((tm, H, W), lambda m: (m, 0, 0)),
            ),
            compiler_params=pltpu.CompilerParams(**cparams),
            cost_estimate=cost,
        )(x_maps, a_h, a_w_t)
        out = out.reshape(N, C, H, W)

    return out


# ---------------------------------------------------------------------------
# Independent numpy reference (loops; no shared matrices) for validation.
# ---------------------------------------------------------------------------
def _ref_adaptive_avg_pool2d(x, out_size):
    N, C, H, W = x.shape
    y = np.zeros((N, C, out_size, out_size), dtype=np.float64)
    for i in range(out_size):
        hs = (i * H) // out_size
        he = -((-(i + 1) * H) // out_size)
        for j in range(out_size):
            ws = (j * W) // out_size
            we = -((-(j + 1) * W) // out_size)
            y[:, :, i, j] = x[:, :, hs:he, ws:we].mean(axis=(2, 3))
    return y


def _ref_bilinear_align_corners(x, H, W):
    N, C, h_in, w_in = x.shape
    y = np.zeros((N, C, H, W), dtype=np.float64)
    for r in range(H):
        sr = 0.0 if (h_in == 1 or H == 1) else r * (h_in - 1) / (H - 1)
        i0 = min(int(np.floor(sr)), h_in - 1)
        i1 = min(i0 + 1, h_in - 1)
        fr = sr - i0
        for c in range(W):
            sc = 0.0 if (w_in == 1 or W == 1) else c * (w_in - 1) / (W - 1)
            j0 = min(int(np.floor(sc)), w_in - 1)
            j1 = min(j0 + 1, w_in - 1)
            fc = sc - j0
            y[:, :, r, c] = ((1 - fr) * (1 - fc) * x[:, :, i0, j0]
                             + (1 - fr) * fc * x[:, :, i0, j1]
                             + fr * (1 - fc) * x[:, :, i1, j0]
                             + fr * fc * x[:, :, i1, j1])
    return y


def _ref_ppm(x, pyramids=PYRAMIDS):
    x = np.asarray(x, dtype=np.float64)
    N, C, H, W = x.shape
    feat = x.copy()
    for b in pyramids:
        p = _ref_adaptive_avg_pool2d(x, b)
        up = _ref_bilinear_align_corners(p, H, W)
        feat = feat + up
    return feat.astype(np.float32)


if __name__ == "__main__":
    key = jax.random.PRNGKey(0)

    # Primary check: N=2, C=4, H=W=16 (HW = 256, already lane-aligned).
    N, C, H, W = 2, 4, 16, 16
    x = jax.random.normal(key, (N, C, H, W), dtype=jnp.float32)
    ref = _ref_ppm(np.asarray(x))

    out = jax.block_until_ready(pyramid_pooling_module(x))
    np.testing.assert_allclose(np.asarray(out), ref, rtol=1e-4, atol=1e-4)

    # Exercise the extreme-size separable fallback (forced at this small shape).
    out_sep = jax.block_until_ready(
        pyramid_pooling_module(x, force_path="separable"))
    np.testing.assert_allclose(np.asarray(out_sep), ref, rtol=1e-4, atol=1e-4)

    # Secondary check: HW not a multiple of 128 (lane padding) + ragged last
    # M-block with a 2-step parallel grid (tm_max=8 forces grid > 1).
    k2 = jax.random.fold_in(key, 1)
    x2 = jax.random.normal(k2, (3, 5, 12, 12), dtype=jnp.float32)
    ref2 = _ref_ppm(np.asarray(x2))
    out2 = jax.block_until_ready(pyramid_pooling_module(x2, tm_max=8))
    np.testing.assert_allclose(np.asarray(out2), ref2, rtol=1e-4, atol=1e-4)

    print("KERNEL_OK")
</pallas_src>

<mosaic_0001>
module attributes {stable_mosaic.version = 11 : i64} {
  func.func @ppm_lowrank_kernel(%arg0: i32, %arg1: memref<8x256xf32, #tpu.memory_space<vmem>>, %arg2: memref<256x128xf32, #tpu.memory_space<vmem>>, %arg3: memref<128x256xf32, #tpu.memory_space<vmem>>, %arg4: memref<8x256xf32, #tpu.memory_space<vmem>>) attributes {dimension_semantics = [#tpu.dimension_semantics<parallel>], iteration_bounds = array<i64: 1>, scalar_prefetch = 0 : i64, scratch_operands = 0 : i64, tpu.core_type = #tpu.core_type<tc>, window_params = [{transform_indices = @transform_0, window_bounds = array<i64: 8, 256>}, {pipeline_mode = #tpu.pipeline_mode<synchronous>, transform_indices = @transform_1, window_bounds = array<i64: 256, 128>}, {pipeline_mode = #tpu.pipeline_mode<synchronous>, transform_indices = @transform_2, window_bounds = array<i64: 128, 256>}, {transform_indices = @transform_3, window_bounds = array<i64: 8, 256>}]} {
    %c0 = arith.constant 0 : index
    %c0_0 = arith.constant 0 : index
    %0 = vector.load %arg1[%c0, %c0_0] : memref<8x256xf32, #tpu.memory_space<vmem>>, vector<8x256xf32>
    %c0_1 = arith.constant 0 : index
    %c0_2 = arith.constant 0 : index
    %1 = vector.load %arg2[%c0_1, %c0_2] : memref<256x128xf32, #tpu.memory_space<vmem>>, vector<256x128xf32>
    %cst = arith.constant dense<0.000000e+00> : vector<8x128xf32>
    %2 = tpu.matmul %0, %1, %cst {dimension_numbers = #tpu.dot_dimension_numbers<[1], [0], [0], [1], [0, 0, 1, 1], [], []>} : vector<8x256xf32>, vector<256x128xf32>, vector<8x128xf32> -> vector<8x128xf32>
    %c0_3 = arith.constant 0 : index
    %c0_4 = arith.constant 0 : index
    %3 = vector.load %arg3[%c0_3, %c0_4] : memref<128x256xf32, #tpu.memory_space<vmem>>, vector<128x256xf32>
    %cst_5 = arith.constant dense<0.000000e+00> : vector<8x256xf32>
    %4 = tpu.matmul %2, %3, %cst_5 {dimension_numbers = #tpu.dot_dimension_numbers<[1], [0], [0], [1], [0, 0, 1, 1], [], []>} : vector<8x128xf32>, vector<128x256xf32>, vector<8x256xf32> -> vector<8x256xf32>
    %5 = arith.addf %0, %4 : vector<8x256xf32>
    %c0_6 = arith.constant 0 : index
    %c0_7 = arith.constant 0 : index
    %6 = vector.load %arg4[%c0_6, %c0_7] : memref<8x256xf32, #tpu.memory_space<vmem>>, vector<8x256xf32>
    tpu.vector_store %arg4[%c0_6, %c0_7], %5 {strides = array<i32>} : memref<8x256xf32, #tpu.memory_space<vmem>>, vector<8x256xf32>,
    return
  }
  func.func @transform_0(%arg0: i32) -> (i32, i32) {
    %c0_i32 = arith.constant 0 : i32
    %c0_i32_0 = arith.constant 0 : i32
    return %arg0, %c0_i32 : i32, i32
  }
  func.func @transform_1(%arg0: i32) -> (i32, i32) {
    %c0_i32 = arith.constant 0 : i32
    %c0_i32_0 = arith.constant 0 : i32
    %c0_i32_1 = arith.constant 0 : i32
    return %c0_i32, %c0_i32_0 : i32, i32
  }
  func.func @transform_2(%arg0: i32) -> (i32, i32) {
    %c0_i32 = arith.constant 0 : i32
    %c0_i32_0 = arith.constant 0 : i32
    %c0_i32_1 = arith.constant 0 : i32
    return %c0_i32, %c0_i32_0 : i32, i32
  }
  func.func @transform_3(%arg0: i32) -> (i32, i32) {
    %c0_i32 = arith.constant 0 : i32
    %c0_i32_0 = arith.constant 0 : i32
    return %arg0, %c0_i32 : i32, i32
  }
}

module attributes {stable_mosaic.version = 11 : i64} {
  func.func @ppm_lowrank_kernel(%arg0: i32, %arg1: memref<8x256xf32, #tpu.memory_space<vmem>>, %arg2: memref<256x128xf32, #tpu.memory_space<vmem>>, %arg3: memref<128x256xf32, #tpu.memory_space<vmem>>, %arg4: memref<8x256xf32, #tpu.memory_space<vmem>>) attributes {dimension_semantics = [#tpu.dimension_semantics<parallel>], iteration_bounds = array<i64: 1>, scalar_prefetch = 0 : i64, scratch_operands = 0 : i64, tpu.core_type = #tpu.core_type<tc>, window_params = [{transform_indices = @transform_0, window_bounds = array<i64: 8, 256>}, {pipeline_mode = #tpu.pipeline_mode<synchronous>, transform_indices = @transform_1, window_bounds = array<i64: 256, 128>}, {pipeline_mode = #tpu.pipeline_mode<synchronous>, transform_indices = @transform_2, window_bounds = array<i64: 128, 256>}, {transform_indices = @transform_3, window_bounds = array<i64: 8, 256>}]} {
    %c0 = arith.constant 0 : index
    %c0_0 = arith.constant 0 : index
    %0 = vector.load %arg1[%c0, %c0_0] : memref<8x256xf32, #tpu.memory_space<vmem>>, vector<8x256xf32>
    %c0_1 = arith.constant 0 : index
    %c0_2 = arith.constant 0 : index
    %1 = vector.load %arg2[%c0_1, %c0_2] : memref<256x128xf32, #tpu.memory_space<vmem>>, vector<256x128xf32>
    %cst = arith.constant dense<0.000000e+00> : vector<8x128xf32>
    %2 = tpu.matmul %0, %1, %cst {dimension_numbers = #tpu.dot_dimension_numbers<[1], [0], [0], [1], [0, 0, 1, 1], [], []>} : vector<8x256xf32>, vector<256x128xf32>, vector<8x128xf32> -> vector<8x128xf32>
    %c0_3 = arith.constant 0 : index
    %c0_4 = arith.constant 0 : index
    %3 = vector.load %arg3[%c0_3, %c0_4] : memref<128x256xf32, #tpu.memory_space<vmem>>, vector<128x256xf32>
    %cst_5 = arith.constant dense<0.000000e+00> : vector<8x256xf32>
    %4 = tpu.matmul %2, %3, %cst_5 {dimension_numbers = #tpu.dot_dimension_numbers<[1], [0], [0], [1], [0, 0, 1, 1], [], []>} : vector<8x128xf32>, vector<128x256xf32>, vector<8x256xf32> -> vector<8x256xf32>
    %5 = arith.addf %0, %4 : vector<8x256xf32>
    %c0_6 = arith.constant 0 : index
    %c0_7 = arith.constant 0 : index
    %6 = vector.load %arg4[%c0_6, %c0_7] : memref<8x256xf32, #tpu.memory_space<vmem>>, vector<8x256xf32>
    tpu.vector_store %arg4[%c0_6, %c0_7], %5 {strides = array<i32>} : memref<8x256xf32, #tpu.memory_space<vmem>>, vector<8x256xf32>,
    return
  }
  func.func @transform_0(%arg0: i32) -> (i32, i32) {
    %c0_i32 = arith.constant 0 : i32
    %c0_i32_0 = arith.constant 0 : i32
    return %arg0, %c0_i32 : i32, i32
  }
  func.func @transform_1(%arg0: i32) -> (i32, i32) {
    %c0_i32 = arith.constant 0 : i32
    %c0_i32_0 = arith.constant 0 : i32
    %c0_i32_1 = arith.constant 0 : i32
    return %c0_i32, %c0_i32_0 : i32, i32
  }
  func.func @transform_2(%arg0: i32) -> (i32, i32) {
    %c0_i32 = arith.constant 0 : i32
    %c0_i32_0 = arith.constant 0 : i32
    %c0_i32_1 = arith.constant 0 : i32
    return %c0_i32, %c0_i32_0 : i32, i32
  }
  func.func @transform_3(%arg0: i32) -> (i32, i32) {
    %c0_i32 = arith.constant 0 : i32
    %c0_i32_0 = arith.constant 0 : i32
    return %arg0, %c0_i32 : i32, i32
  }
}

</mosaic_0001>

<llo_original>
// kernel: tpu_custom_call.1
$region0: #{tpu_custom_call.1}
  #allocation0 [shape = 'u32[]', space=smem, size = 0x4, offset = 0x4, fixed_abs, tag = 'smem constant byte address 0x4 - core index']
  #allocation1 [shape = 'u32[144,128]{1,0:T(1,128)}', space=vmem, size = 0x12000, scoped, tag = 'internal scratch']
  %s0 = inlined_call_operand.hbm [shape: f32[8,256], index: 0, kind: input, shape index: {}]
  %s1 = inlined_call_operand.hbm [shape: f32[256,128], index: 1, kind: input, shape index: {}]
  %s2 = inlined_call_operand.hbm [shape: f32[128,256], index: 2, kind: input, shape index: {}]
  %s3 = inlined_call_operand.hbm [shape: f32[8,256], index: 3, kind: output, shape index: {}]
  %s4 = sld [smem:[#allocation0]]
  $region34: #{tpu_custom_call.1} parent=0
    _
  %s6 = ssub.s32 1, %s4
  %s7 = scalar_select 0, %s6, %s4
  $region1: #{tpu_custom_call.1} parent=0
    #allocation2 [shape = 'u8[8192]{0}', space=vmem, size = 0x2000, scoped, tag = 'input window, operand 0, single buffered']
    #allocation3 [shape = 's32[1]{0}', space=sflag, size = 0x4, scoped, tag = 'scoped memory for tpu_custom_call.1']
    #allocation4 [shape = 's32[1]{0}', space=sflag, size = 0x4, scoped, tag = 'scoped memory for tpu_custom_call.1']
    #allocation5 [shape = 'u8[131072]{0}', space=vmem, size = 0x20000, scoped, tag = 'input window, operand 1, single buffered']
    #allocation6 [shape = 's32[1]{0}', space=sflag, size = 0x4, scoped, tag = 'scoped memory for tpu_custom_call.1']
    #allocation7 [shape = 'u8[131072]{0}', space=vmem, size = 0x20000, scoped, tag = 'input window, operand 2, single buffered']
    #allocation8 [shape = 'u8[8192]{0}', space=vmem, size = 0x2000, scoped, tag = 'output window, operand 0, single buffered']
    %8 = vsyncpa [#allocation3], 0
    %9 = vsyncpa [#allocation6], 0
    %10 = vsyncpa [#allocation4], 0
    // Predicated region
    $region2: #{tpu_custom_call.1} parent=1 // pred_check
      _
    $region3: #{tpu_custom_call.1} parent=1 // pred_check_branch
      %12 = sbr.rel (0) target = $region5
    $region4: #{tpu_custom_call.1} parent=1 // pred_region
      %s14 = ssub.s32 256, 256
      %15 = vsyncadd [#allocation3], %s14
      %s17 = sshll.u32 [#allocation2], 4
      %s18 = int_to_ptr.vmem [resolvable:$true] %s17
      %20 = dma.hbm_to_vmem [thread:$0]  %s0, 256, %s18, [#allocation3]
    $region5: #{tpu_custom_call.1} parent=1 // pred_fallthru
      _
    // Predicated region
    $region6: #{tpu_custom_call.1} parent=1 // pred_check
      _
    $region7: #{tpu_custom_call.1} parent=1 // pred_check_branch
      %22 = sbr.rel (0) target = $region9
    $region8: #{tpu_custom_call.1} parent=1 // pred_region
      %s24 = ssub.s32 4096, 4096
      %25 = vsyncadd [#allocation6], %s24
      %s26 = sshll.u32 [#allocation5], 4
      %s27 = int_to_ptr.vmem [resolvable:$true] %s26
      %32 = dma.hbm_to_vmem [thread:$0]  %s1, 4096, %s27, [#allocation6], 128, 128, 8
    $region9: #{tpu_custom_call.1} parent=1 // pred_fallthru
      _
    // Predicated region
    $region10: #{tpu_custom_call.1} parent=1 // pred_check
      _
    $region11: #{tpu_custom_call.1} parent=1 // pred_check_branch
      %34 = sbr.rel (0) target = $region13
    $region12: #{tpu_custom_call.1} parent=1 // pred_region
      %s36 = ssub.s32 4096, 4096
      %37 = vsyncadd [#allocation6], %s36
      %s38 = sshll.u32 [#allocation7], 4
      %s39 = int_to_ptr.vmem [resolvable:$true] %s38
      %44 = dma.hbm_to_vmem [thread:$0]  %s2, 4096, %s39, [#allocation6], 256, 256, 16
    $region13: #{tpu_custom_call.1} parent=1 // pred_fallthru
      _
    // Predicated region
    $region14: #{tpu_custom_call.1} parent=1 // pred_check
      _
    $region15: #{tpu_custom_call.1} parent=1 // pred_check_branch
      %46 = sbr.rel (0) target = $region17
    $region16: #{tpu_custom_call.1} parent=1 // pred_region
      %47 = dma.done [#allocation3], 256
    $region17: #{tpu_custom_call.1} parent=1 // pred_fallthru
      _
    // Predicated region
    $region18: #{tpu_custom_call.1} parent=1 // pred_check
      _
    $region19: #{tpu_custom_call.1} parent=1 // pred_check_branch
      %49 = sbr.rel (0) target = $region21
    $region20: #{tpu_custom_call.1} parent=1 // pred_region
      %50 = dma.done [#allocation6], 4096
    $region21: #{tpu_custom_call.1} parent=1 // pred_fallthru
      _
    // Predicated region
    $region22: #{tpu_custom_call.1} parent=1 // pred_check
      _
    $region23: #{tpu_custom_call.1} parent=1 // pred_check_branch
      %52 = sbr.rel (0) target = $region25
    $region24: #{tpu_custom_call.1} parent=1 // pred_region
      %53 = dma.done [#allocation6], 4096
    $region25: #{tpu_custom_call.1} parent=1 // pred_fallthru
      _
    %v54 = vld [vmem:[#allocation2] sm:$0xff]
    %v55 = vld [vmem:[#allocation2 + $0x8] sm:$0xff]
    %v56 = vld [vmem:[#allocation5] sm:$0xff]
    %v57 = vld [vmem:[#allocation5 + $0x8] sm:$0xff]
    %v58 = vld [vmem:[#allocation5 + $0x10] sm:$0xff]
    %v59 = vld [vmem:[#allocation5 + $0x18] sm:$0xff]
    %v60 = vld [vmem:[#allocation5 + $0x20] sm:$0xff]
    %v61 = vld [vmem:[#allocation5 + $0x28] sm:$0xff]
    %v62 = vld [vmem:[#allocation5 + $0x30] sm:$0xff]
    %v63 = vld [vmem:[#allocation5 + $0x38] sm:$0xff]
    %v64 = vld [vmem:[#allocation5 + $0x40] sm:$0xff]
    %v65 = vld [vmem:[#allocation5 + $0x48] sm:$0xff]
    %v66 = vld [vmem:[#allocation5 + $0x50] sm:$0xff]
    %v67 = vld [vmem:[#allocation5 + $0x58] sm:$0xff]
    %v68 = vld [vmem:[#allocation5 + $0x60] sm:$0xff]
    %v69 = vld [vmem:[#allocation5 + $0x68] sm:$0xff]
    %v70 = vld [vmem:[#allocation5 + $0x70] sm:$0xff]
    %v71 = vld [vmem:[#allocation5 + $0x78] sm:$0xff]
    %v72 = vld [vmem:[#allocation5 + $0x80] sm:$0xff]
    %v73 = vld [vmem:[#allocation5 + $0x88] sm:$0xff]
    %v74 = vld [vmem:[#allocation5 + $0x90] sm:$0xff]
    %v75 = vld [vmem:[#allocation5 + $0x98] sm:$0xff]
    %v76 = vld [vmem:[#allocation5 + $0xa0] sm:$0xff]
    %v77 = vld [vmem:[#allocation5 + $0xa8] sm:$0xff]
    %v78 = vld [vmem:[#allocation5 + $0xb0] sm:$0xff]
    %v79 = vld [vmem:[#allocation5 + $0xb8] sm:$0xff]
    %v80 = vld [vmem:[#allocation5 + $0xc0] sm:$0xff]
    %v81 = vld [vmem:[#allocation5 + $0xc8] sm:$0xff]
    %v82 = vld [vmem:[#allocation5 + $0xd0] sm:$0xff]
    %v83 = vld [vmem:[#allocation5 + $0xd8] sm:$0xff]
    %v84 = vld [vmem:[#allocation5 + $0xe0] sm:$0xff]
    %v85 = vld [vmem:[#allocation5 + $0xe8] sm:$0xff]
    %v86 = vld [vmem:[#allocation5 + $0xf0] sm:$0xff]
    %v87 = vld [vmem:[#allocation5 + $0xf8] sm:$0xff]
    %88 = vmatprep.subr.mxu0 0.0
    %89 = vmatpush1.msra.mxu0 %v56
    %90 = vmatprep.subr.mxu0 0.0
    %91 = vmatpush1.msra.mxu0 %v57
    %92 = vmatprep.subr.mxu0 0.0
    %93 = vmatpush1.msra.mxu0 %v58
    %94 = vmatprep.subr.mxu0 0.0
    %95 = vmatpush1.msra.mxu0 %v59
    %96 = vmatprep.subr.mxu0 0.0
    %97 = vmatpush1.msra.mxu0 %v60
    %98 = vmatprep.subr.mxu0 0.0
    %99 = vmatpush1.msra.mxu0 %v61
    %100 = vmatprep.subr.mxu0 0.0
    %101 = vmatpush1.msra.mxu0 %v62
    %102 = vmatprep.subr.mxu0 0.0
    %103 = vmatpush1.msra.mxu0 %v63
    %104 = vmatprep.subr.mxu0 0.0
    %105 = vmatpush1.msra.mxu0 %v64
    %106 = vmatprep.subr.mxu0 0.0
    %107 = vmatpush1.msra.mxu0 %v65
    %108 = vmatprep.subr.mxu0 0.0
    %109 = vmatpush1.msra.mxu0 %v66
    %110 = vmatprep.subr.mxu0 0.0
    %111 = vmatpush1.msra.mxu0 %v67
    %112 = vmatprep.subr.mxu0 0.0
    %113 = vmatpush1.msra.mxu0 %v68
    %114 = vmatprep.subr.mxu0 0.0
    %115 = vmatpush1.msra.mxu0 %v69
    %116 = vmatprep.subr.mxu0 0.0
    %117 = vmatpush1.msra.mxu0 %v70
    %118 = vmatprep.subr.mxu0 0.0
    %119 = vmatpush1.msra.mxu0 %v71
    %120 = vmatprep.subr.mxu0 0.0
    %121 = vmatpush1.msra.mxu0 %v72
    %122 = vmatprep.subr.mxu0 0.0
    %123 = vmatpush1.msra.mxu0 %v73
    %124 = vmatprep.subr.mxu0 0.0
    %125 = vmatpush1.msra.mxu0 %v74
    %126 = vmatprep.subr.mxu0 0.0
    %127 = vmatpush1.msra.mxu0 %v75
    %128 = vmatprep.subr.mxu0 0.0
    %129 = vmatpush1.msra.mxu0 %v76
    %130 = vmatprep.subr.mxu0 0.0
    %131 = vmatpush1.msra.mxu0 %v77
    %132 = vmatprep.subr.mxu0 0.0
    %133 = vmatpush1.msra.mxu0 %v78
    %134 = vmatprep.subr.mxu0 0.0
    %135 = vmatpush1.msra.mxu0 %v79
    %136 = vmatprep.subr.mxu0 0.0
    %137 = vmatpush1.msra.mxu0 %v80
    %138 = vmatprep.subr.mxu0 0.0
    %139 = vmatpush1.msra.mxu0 %v81
    %140 = vmatprep.subr.mxu0 0.0
    %141 = vmatpush1.msra.mxu0 %v82
    %142 = vmatprep.subr.mxu0 0.0
    %143 = vmatpush1.msra.mxu0 %v83
    %144 = vmatprep.subr.mxu0 0.0
    %145 = vmatpush1.msra.mxu0 %v84
    %146 = vmatprep.subr.mxu0 0.0
    %147 = vmatpush1.msra.mxu0 %v85
    %148 = vmatprep.subr.mxu0 0.0
    %149 = vmatpush1.msra.mxu0 %v86
    %150 = vmatprep.subr.mxu0 0.0
    %151 = vmatpush1.msra.mxu0 %v87
    %152 = vmatprep.mubr.f32.mxu0 %v55
    %153 = vmatmul.mubr.f32.gmra.mrb[0].mxu0 %v54
    %v154 = vpop.f32.mrb[0].mxu0
    %v155 = vadd.f32 0.0, %v154
    %v156 = vpop.f32.mrb[0].mxu0
    %157 = vdwg.mxu0
    %v158 = vld [vmem:[#allocation7] sm:$0xff]
    %v159 = vld [vmem:[#allocation7 + $0x8] sm:$0xff]
    %v160 = vld [vmem:[#allocation7 + $0x10] sm:$0xff]
    %v161 = vld [vmem:[#allocation7 + $0x18] sm:$0xff]
    %v162 = vld [vmem:[#allocation7 + $0x20] sm:$0xff]
    %v163 = vld [vmem:[#allocation7 + $0x28] sm:$0xff]
    %v164 = vld [vmem:[#allocation7 + $0x30] sm:$0xff]
    %v165 = vld [vmem:[#allocation7 + $0x38] sm:$0xff]
    %v166 = vld [vmem:[#allocation7 + $0x40] sm:$0xff]
    %v167 = vld [vmem:[#allocation7 + $0x48] sm:$0xff]
    %v168 = vld [vmem:[#allocation7 + $0x50] sm:$0xff]
    %v169 = vld [vmem:[#allocation7 + $0x58] sm:$0xff]
    %v170 = vld [vmem:[#allocation7 + $0x60] sm:$0xff]
    %v171 = vld [vmem:[#allocation7 + $0x68] sm:$0xff]
    %v172 = vld [vmem:[#allocation7 + $0x70] sm:$0xff]
    %v173 = vld [vmem:[#allocation7 + $0x78] sm:$0xff]
    %v174 = vld [vmem:[#allocation7 + $0x80] sm:$0xff]
    %v175 = vld [vmem:[#allocation7 + $0x88] sm:$0xff]
    %v176 = vld [vmem:[#allocation7 + $0x90] sm:$0xff]
    %v177 = vld [vmem:[#allocation7 + $0x98] sm:$0xff]
    %v178 = vld [vmem:[#allocation7 + $0xa0] sm:$0xff]
    %v179 = vld [vmem:[#allocation7 + $0xa8] sm:$0xff]
    %v180 = vld [vmem:[#allocation7 + $0xb0] sm:$0xff]
    %v181 = vld [vmem:[#allocation7 + $0xb8] sm:$0xff]
    %v182 = vld [vmem:[#allocation7 + $0xc0] sm:$0xff]
    %v183 = vld [vmem:[#allocation7 + $0xc8] sm:$0xff]
    %v184 = vld [vmem:[#allocation7 + $0xd0] sm:$0xff]
    %v185 = vld [vmem:[#allocation7 + $0xd8] sm:$0xff]
    %v186 = vld [vmem:[#allocation7 + $0xe0] sm:$0xff]
    %v187 = vld [vmem:[#allocation7 + $0xe8] sm:$0xff]
    %v188 = vld [vmem:[#allocation7 + $0xf0] sm:$0xff]
    %v189 = vld [vmem:[#allocation7 + $0xf8] sm:$0xff]
    %190 = vmatprep.subr.mxu0 %v159
    %191 = vmatpush1.msra.mxu0 %v158
    %192 = vmatprep.subr.mxu0 %v161
    %193 = vmatpush1.msra.mxu0 %v160
    %194 = vmatprep.subr.mxu0 %v163
    %195 = vmatpush1.msra.mxu0 %v162
    %196 = vmatprep.subr.mxu0 %v165
    %197 = vmatpush1.msra.mxu0 %v164
    %198 = vmatprep.subr.mxu0 %v167
    %199 = vmatpush1.msra.mxu0 %v166
    %200 = vmatprep.subr.mxu0 %v169
    %201 = vmatpush1.msra.mxu0 %v168
    %202 = vmatprep.subr.mxu0 %v171
    %203 = vmatpush1.msra.mxu0 %v170
    %204 = vmatprep.subr.mxu0 %v173
    %205 = vmatpush1.msra.mxu0 %v172
    %206 = vmatprep.subr.mxu0 %v175
    %207 = vmatpush1.msra.mxu0 %v174
    %208 = vmatprep.subr.mxu0 %v177
    %209 = vmatpush1.msra.mxu0 %v176
    %210 = vmatprep.subr.mxu0 %v179
    %211 = vmatpush1.msra.mxu0 %v178
    %212 = vmatprep.subr.mxu0 %v181
    %213 = vmatpush1.msra.mxu0 %v180
    %214 = vmatprep.subr.mxu0 %v183
    %215 = vmatpush1.msra.mxu0 %v182
    %216 = vmatprep.subr.mxu0 %v185
    %217 = vmatpush1.msra.mxu0 %v184
    %218 = vmatprep.subr.mxu0 %v187
    %219 = vmatpush1.msra.mxu0 %v186
    %220 = vmatprep.subr.mxu0 %v189
    %221 = vmatpush1.msra.mxu0 %v188
    %222 = vmatprep.subr.mxu0 0.0
    %223 = vmatpush1.msra.mxu0 0.0
    %224 = vmatprep.subr.mxu0 0.0
    %225 = vmatpush1.msra.mxu0 0.0
    %226 = vmatprep.subr.mxu0 0.0
    %227 = vmatpush1.msra.mxu0 0.0
    %228 = vmatprep.subr.mxu0 0.0
    %229 = vmatpush1.msra.mxu0 0.0
    %230 = vmatprep.subr.mxu0 0.0
    %231 = vmatpush1.msra.mxu0 0.0
    %232 = vmatprep.subr.mxu0 0.0
    %233 = vmatpush1.msra.mxu0 0.0
    %234 = vmatprep.subr.mxu0 0.0
    %235 = vmatpush1.msra.mxu0 0.0
    %236 = vmatprep.subr.mxu0 0.0
    %237 = vmatpush1.msra.mxu0 0.0
    %238 = vmatprep.subr.mxu0 0.0
    %239 = vmatpush1.msra.mxu0 0.0
    %240 = vmatprep.subr.mxu0 0.0
    %241 = vmatpush1.msra.mxu0 0.0
    %242 = vmatprep.subr.mxu0 0.0
    %243 = vmatpush1.msra.mxu0 0.0
    %244 = vmatprep.subr.mxu0 0.0
    %245 = vmatpush1.msra.mxu0 0.0
    %246 = vmatprep.subr.mxu0 0.0
    %247 = vmatpush1.msra.mxu0 0.0
    %248 = vmatprep.subr.mxu0 0.0
    %249 = vmatpush1.msra.mxu0 0.0
    %250 = vmatprep.subr.mxu0 0.0
    %251 = vmatpush1.msra.mxu0 0.0
    %252 = vmatprep.subr.mxu0 0.0
    %253 = vmatpush1.msra.mxu0 0.0
    %254 = vmatprep.mubr.f32.mxu0 0.0
    %255 = vmatmul.mubr.f32.gmra.mrb[0].mxu0 %v155
    %v256 = vpop.f32.mrb[0].mxu0
    %v257 = vadd.f32 0.0, %v256
    %v258 = vpop.f32.mrb[0].mxu0
    %v259 = vadd.f32 0.0, %v258
    %260 = vdwg.mxu0
    %v261 = vadd.f32 %v54, %v257
    %v262 = vadd.f32 %v55, %v259
    %263 = vst [vmem:[#allocation8] sm:$0xff] %v261
    %264 = vst [vmem:[#allocation8 + $0x8] sm:$0xff] %v262
    // Predicated region
    $region26: #{tpu_custom_call.1} parent=1 // pred_check
      _
    $region27: #{tpu_custom_call.1} parent=1 // pred_check_branch
      %266 = sbr.rel (0) target = $region29
    $region28: #{tpu_custom_call.1} parent=1 // pred_region
      %s268 = ssub.s32 256, 256
      %269 = vsyncadd [#allocation4], %s268
      %s271 = sshll.u32 [#allocation8], 4
      %s272 = int_to_ptr.vmem [resolvable:$true] %s271
      %274 = dma.vmem_to_hbm [thread:$0]  %s272, 256, %s3, [#allocation4]
    $region29: #{tpu_custom_call.1} parent=1 // pred_fallthru
      _
    // Predicated region
    $region30: #{tpu_custom_call.1} parent=1 // pred_check
      _
    $region31: #{tpu_custom_call.1} parent=1 // pred_check_branch
      %276 = sbr.rel (0) target = $region33
    $region32: #{tpu_custom_call.1} parent=1 // pred_region
      %277 = dma.done [#allocation4], 256
    $region33: #{tpu_custom_call.1} parent=1 // pred_fallthru
      _
    %278 = vsyncpa [#allocation3], 1
    %279 = vsyncpa [#allocation6], 1
    %280 = vsyncpa [#allocation4], 1

// kernel: tpu_custom_call.1
$region0: #{tpu_custom_call.1}
  #allocation0 [shape = 'u32[]', space=smem, size = 0x4, offset = 0x4, fixed_abs, tag = 'smem constant byte address 0x4 - core index']
  #allocation1 [shape = 'u32[144,128]{1,0:T(1,128)}', space=vmem, size = 0x12000, scoped, tag = 'internal scratch']
  %s0 = inlined_call_operand.hbm [shape: f32[8,256], index: 0, kind: input, shape index: {}]
  %s1 = inlined_call_operand.hbm [shape: f32[256,128], index: 1, kind: input, shape index: {}]
  %s2 = inlined_call_operand.hbm [shape: f32[128,256], index: 2, kind: input, shape index: {}]
  %s3 = inlined_call_operand.hbm [shape: f32[8,256], index: 3, kind: output, shape index: {}]
  %s4 = sld [smem:[#allocation0]]
  $region34: #{tpu_custom_call.1} parent=0
    _
  %s6 = ssub.s32 1, %s4
  %s7 = scalar_select 0, %s6, %s4
  $region1: #{tpu_custom_call.1} parent=0
    #allocation2 [shape = 'u8[8192]{0}', space=vmem, size = 0x2000, scoped, tag = 'input window, operand 0, single buffered']
    #allocation3 [shape = 's32[1]{0}', space=sflag, size = 0x4, scoped, tag = 'scoped memory for tpu_custom_call.1']
    #allocation4 [shape = 's32[1]{0}', space=sflag, size = 0x4, scoped, tag = 'scoped memory for tpu_custom_call.1']
    #allocation5 [shape = 'u8[131072]{0}', space=vmem, size = 0x20000, scoped, tag = 'input window, operand 1, single buffered']
    #allocation6 [shape = 's32[1]{0}', space=sflag, size = 0x4, scoped, tag = 'scoped memory for tpu_custom_call.1']
    #allocation7 [shape = 'u8[131072]{0}', space=vmem, size = 0x20000, scoped, tag = 'input window, operand 2, single buffered']
    #allocation8 [shape = 'u8[8192]{0}', space=vmem, size = 0x2000, scoped, tag = 'output window, operand 0, single buffered']
    %8 = vsyncpa [#allocation3], 0
    %9 = vsyncpa [#allocation6], 0
    %10 = vsyncpa [#allocation4], 0
    // Predicated region
    $region2: #{tpu_custom_call.1} parent=1 // pred_check
      _
    $region3: #{tpu_custom_call.1} parent=1 // pred_check_branch
      %12 = sbr.rel (0) target = $region5
    $region4: #{tpu_custom_call.1} parent=1 // pred_region
      %s14 = ssub.s32 256, 256
      %15 = vsyncadd [#allocation3], %s14
      %s17 = sshll.u32 [#allocation2], 4
      %s18 = int_to_ptr.vmem [resolvable:$true] %s17
      %20 = dma.hbm_to_vmem [thread:$0]  %s0, 256, %s18, [#allocation3]
    $region5: #{tpu_custom_call.1} parent=1 // pred_fallthru
      _
    // Predicated region
    $region6: #{tpu_custom_call.1} parent=1 // pred_check
      _
    $region7: #{tpu_custom_call.1} parent=1 // pred_check_branch
      %22 = sbr.rel (0) target = $region9
    $region8: #{tpu_custom_call.1} parent=1 // pred_region
      %s24 = ssub.s32 4096, 4096
      %25 = vsyncadd [#allocation6], %s24
      %s26 = sshll.u32 [#allocation5], 4
      %s27 = int_to_ptr.vmem [resolvable:$true] %s26
      %32 = dma.hbm_to_vmem [thread:$0]  %s1, 4096, %s27, [#allocation6], 128, 128, 8
    $region9: #{tpu_custom_call.1} parent=1 // pred_fallthru
      _
    // Predicated region
    $region10: #{tpu_custom_call.1} parent=1 // pred_check
      _
    $region11: #{tpu_custom_call.1} parent=1 // pred_check_branch
      %34 = sbr.rel (0) target = $region13
    $region12: #{tpu_custom_call.1} parent=1 // pred_region
      %s36 = ssub.s32 4096, 4096
      %37 = vsyncadd [#allocation6], %s36
      %s38 = sshll.u32 [#allocation7], 4
      %s39 = int_to_ptr.vmem [resolvable:$true] %s38
      %44 = dma.hbm_to_vmem [thread:$0]  %s2, 4096, %s39, [#allocation6], 256, 256, 16
    $region13: #{tpu_custom_call.1} parent=1 // pred_fallthru
      _
    // Predicated region
    $region14: #{tpu_custom_call.1} parent=1 // pred_check
      _
    $region15: #{tpu_custom_call.1} parent=1 // pred_check_branch
      %46 = sbr.rel (0) target = $region17
    $region16: #{tpu_custom_call.1} parent=1 // pred_region
      %47 = dma.done [#allocation3], 256
    $region17: #{tpu_custom_call.1} parent=1 // pred_fallthru
      _
    // Predicated region
    $region18: #{tpu_custom_call.1} parent=1 // pred_check
      _
    $region19: #{tpu_custom_call.1} parent=1 // pred_check_branch
      %49 = sbr.rel (0) target = $region21
    $region20: #{tpu_custom_call.1} parent=1 // pred_region
      %50 = dma.done [#allocation6], 4096
    $region21: #{tpu_custom_call.1} parent=1 // pred_fallthru
      _
    // Predicated region
    $region22: #{tpu_custom_call.1} parent=1 // pred_check
      _
    $region23: #{tpu_custom_call.1} parent=1 // pred_check_branch
      %52 = sbr.rel (0) target = $region25
    $region24: #{tpu_custom_call.1} parent=1 // pred_region
      %53 = dma.done [#allocation6], 4096
    $region25: #{tpu_custom_call.1} parent=1 // pred_fallthru
      _
    %v54 = vld [vmem:[#allocation2] sm:$0xff]
    %v55 = vld [vmem:[#allocation2 + $0x8] sm:$0xff]
    %v56 = vld [vmem:[#allocation5] sm:$0xff]
    %v57 = vld [vmem:[#allocation5 + $0x8] sm:$0xff]
    %v58 = vld [vmem:[#allocation5 + $0x10] sm:$0xff]
    %v59 = vld [vmem:[#allocation5 + $0x18] sm:$0xff]
    %v60 = vld [vmem:[#allocation5 + $0x20] sm:$0xff]
    %v61 = vld [vmem:[#allocation5 + $0x28] sm:$0xff]
    %v62 = vld [vmem:[#allocation5 + $0x30] sm:$0xff]
    %v63 = vld [vmem:[#allocation5 + $0x38] sm:$0xff]
    %v64 = vld [vmem:[#allocation5 + $0x40] sm:$0xff]
    %v65 = vld [vmem:[#allocation5 + $0x48] sm:$0xff]
    %v66 = vld [vmem:[#allocation5 + $0x50] sm:$0xff]
    %v67 = vld [vmem:[#allocation5 + $0x58] sm:$0xff]
    %v68 = vld [vmem:[#allocation5 + $0x60] sm:$0xff]
    %v69 = vld [vmem:[#allocation5 + $0x68] sm:$0xff]
    %v70 = vld [vmem:[#allocation5 + $0x70] sm:$0xff]
    %v71 = vld [vmem:[#allocation5 + $0x78] sm:$0xff]
    %v72 = vld [vmem:[#allocation5 + $0x80] sm:$0xff]
    %v73 = vld [vmem:[#allocation5 + $0x88] sm:$0xff]
    %v74 = vld [vmem:[#allocation5 + $0x90] sm:$0xff]
    %v75 = vld [vmem:[#allocation5 + $0x98] sm:$0xff]
    %v76 = vld [vmem:[#allocation5 + $0xa0] sm:$0xff]
    %v77 = vld [vmem:[#allocation5 + $0xa8] sm:$0xff]
    %v78 = vld [vmem:[#allocation5 + $0xb0] sm:$0xff]
    %v79 = vld [vmem:[#allocation5 + $0xb8] sm:$0xff]
    %v80 = vld [vmem:[#allocation5 + $0xc0] sm:$0xff]
    %v81 = vld [vmem:[#allocation5 + $0xc8] sm:$0xff]
    %v82 = vld [vmem:[#allocation5 + $0xd0] sm:$0xff]
    %v83 = vld [vmem:[#allocation5 + $0xd8] sm:$0xff]
    %v84 = vld [vmem:[#allocation5 + $0xe0] sm:$0xff]
    %v85 = vld [vmem:[#allocation5 + $0xe8] sm:$0xff]
    %v86 = vld [vmem:[#allocation5 + $0xf0] sm:$0xff]
    %v87 = vld [vmem:[#allocation5 + $0xf8] sm:$0xff]
    %88 = vmatprep.subr.mxu0 0.0
    %89 = vmatpush1.msra.mxu0 %v56
    %90 = vmatprep.subr.mxu0 0.0
    %91 = vmatpush1.msra.mxu0 %v57
    %92 = vmatprep.subr.mxu0 0.0
    %93 = vmatpush1.msra.mxu0 %v58
    %94 = vmatprep.subr.mxu0 0.0
    %95 = vmatpush1.msra.mxu0 %v59
    %96 = vmatprep.subr.mxu0 0.0
    %97 = vmatpush1.msra.mxu0 %v60
    %98 = vmatprep.subr.mxu0 0.0
    %99 = vmatpush1.msra.mxu0 %v61
    %100 = vmatprep.subr.mxu0 0.0
    %101 = vmatpush1.msra.mxu0 %v62
    %102 = vmatprep.subr.mxu0 0.0
    %103 = vmatpush1.msra.mxu0 %v63
    %104 = vmatprep.subr.mxu0 0.0
    %105 = vmatpush1.msra.mxu0 %v64
    %106 = vmatprep.subr.mxu0 0.0
    %107 = vmatpush1.msra.mxu0 %v65
    %108 = vmatprep.subr.mxu0 0.0
    %109 = vmatpush1.msra.mxu0 %v66
    %110 = vmatprep.subr.mxu0 0.0
    %111 = vmatpush1.msra.mxu0 %v67
    %112 = vmatprep.subr.mxu0 0.0
    %113 = vmatpush1.msra.mxu0 %v68
    %114 = vmatprep.subr.mxu0 0.0
    %115 = vmatpush1.msra.mxu0 %v69
    %116 = vmatprep.subr.mxu0 0.0
    %117 = vmatpush1.msra.mxu0 %v70
    %118 = vmatprep.subr.mxu0 0.0
    %119 = vmatpush1.msra.mxu0 %v71
    %120 = vmatprep.subr.mxu0 0.0
    %121 = vmatpush1.msra.mxu0 %v72
    %122 = vmatprep.subr.mxu0 0.0
    %123 = vmatpush1.msra.mxu0 %v73
    %124 = vmatprep.subr.mxu0 0.0
    %125 = vmatpush1.msra.mxu0 %v74
    %126 = vmatprep.subr.mxu0 0.0
    %127 = vmatpush1.msra.mxu0 %v75
    %128 = vmatprep.subr.mxu0 0.0
    %129 = vmatpush1.msra.mxu0 %v76
    %130 = vmatprep.subr.mxu0 0.0
    %131 = vmatpush1.msra.mxu0 %v77
    %132 = vmatprep.subr.mxu0 0.0
    %133 = vmatpush1.msra.mxu0 %v78
    %134 = vmatprep.subr.mxu0 0.0
    %135 = vmatpush1.msra.mxu0 %v79
    %136 = vmatprep.subr.mxu0 0.0
    %137 = vmatpush1.msra.mxu0 %v80
    %138 = vmatprep.subr.mxu0 0.0
    %139 = vmatpush1.msra.mxu0 %v81
    %140 = vmatprep.subr.mxu0 0.0
    %141 = vmatpush1.msra.mxu0 %v82
    %142 = vmatprep.subr.mxu0 0.0
    %143 = vmatpush1.msra.mxu0 %v83
    %144 = vmatprep.subr.mxu0 0.0
    %145 = vmatpush1.msra.mxu0 %v84
    %146 = vmatprep.subr.mxu0 0.0
    %147 = vmatpush1.msra.mxu0 %v85
    %148 = vmatprep.subr.mxu0 0.0
    %149 = vmatpush1.msra.mxu0 %v86
    %150 = vmatprep.subr.mxu0 0.0
    %151 = vmatpush1.msra.mxu0 %v87
    %152 = vmatprep.mubr.f32.mxu0 %v55
    %153 = vmatmul.mubr.f32.gmra.mrb[0].mxu0 %v54
    %v154 = vpop.f32.mrb[0].mxu0
    %v155 = vadd.f32 0.0, %v154
    %v156 = vpop.f32.mrb[0].mxu0
    %157 = vdwg.mxu0
    %v158 = vld [vmem:[#allocation7] sm:$0xff]
    %v159 = vld [vmem:[#allocation7 + $0x8] sm:$0xff]
    %v160 = vld [vmem:[#allocation7 + $0x10] sm:$0xff]
    %v161 = vld [vmem:[#allocation7 + $0x18] sm:$0xff]
    %v162 = vld [vmem:[#allocation7 + $0x20] sm:$0xff]
    %v163 = vld [vmem:[#allocation7 + $0x28] sm:$0xff]
    %v164 = vld [vmem:[#allocation7 + $0x30] sm:$0xff]
    %v165 = vld [vmem:[#allocation7 + $0x38] sm:$0xff]
    %v166 = vld [vmem:[#allocation7 + $0x40] sm:$0xff]
    %v167 = vld [vmem:[#allocation7 + $0x48] sm:$0xff]
    %v168 = vld [vmem:[#allocation7 + $0x50] sm:$0xff]
    %v169 = vld [vmem:[#allocation7 + $0x58] sm:$0xff]
    %v170 = vld [vmem:[#allocation7 + $0x60] sm:$0xff]
    %v171 = vld [vmem:[#allocation7 + $0x68] sm:$0xff]
    %v172 = vld [vmem:[#allocation7 + $0x70] sm:$0xff]
    %v173 = vld [vmem:[#allocation7 + $0x78] sm:$0xff]
    %v174 = vld [vmem:[#allocation7 + $0x80] sm:$0xff]
    %v175 = vld [vmem:[#allocation7 + $0x88] sm:$0xff]
    %v176 = vld [vmem:[#allocation7 + $0x90] sm:$0xff]
    %v177 = vld [vmem:[#allocation7 + $0x98] sm:$0xff]
    %v178 = vld [vmem:[#allocation7 + $0xa0] sm:$0xff]
    %v179 = vld [vmem:[#allocation7 + $0xa8] sm:$0xff]
    %v180 = vld [vmem:[#allocation7 + $0xb0] sm:$0xff]
    %v181 = vld [vmem:[#allocation7 + $0xb8] sm:$0xff]
    %v182 = vld [vmem:[#allocation7 + $0xc0] sm:$0xff]
    %v183 = vld [vmem:[#allocation7 + $0xc8] sm:$0xff]
    %v184 = vld [vmem:[#allocation7 + $0xd0] sm:$0xff]
    %v185 = vld [vmem:[#allocation7 + $0xd8] sm:$0xff]
    %v186 = vld [vmem:[#allocation7 + $0xe0] sm:$0xff]
    %v187 = vld [vmem:[#allocation7 + $0xe8] sm:$0xff]
    %v188 = vld [vmem:[#allocation7 + $0xf0] sm:$0xff]
    %v189 = vld [vmem:[#allocation7 + $0xf8] sm:$0xff]
    %190 = vmatprep.subr.mxu0 %v159
    %191 = vmatpush1.msra.mxu0 %v158
    %192 = vmatprep.subr.mxu0 %v161
    %193 = vmatpush1.msra.mxu0 %v160
    %194 = vmatprep.subr.mxu0 %v163
    %195 = vmatpush1.msra.mxu0 %v162
    %196 = vmatprep.subr.mxu0 %v165
    %197 = vmatpush1.msra.mxu0 %v164
    %198 = vmatprep.subr.mxu0 %v167
    %199 = vmatpush1.msra.mxu0 %v166
    %200 = vmatprep.subr.mxu0 %v169
    %201 = vmatpush1.msra.mxu0 %v168
    %202 = vmatprep.subr.mxu0 %v171
    %203 = vmatpush1.msra.mxu0 %v170
    %204 = vmatprep.subr.mxu0 %v173
    %205 = vmatpush1.msra.mxu0 %v172
    %206 = vmatprep.subr.mxu0 %v175
    %207 = vmatpush1.msra.mxu0 %v174
    %208 = vmatprep.subr.mxu0 %v177
    %209 = vmatpush1.msra.mxu0 %v176
    %210 = vmatprep.subr.mxu0 %v179
    %211 = vmatpush1.msra.mxu0 %v178
    %212 = vmatprep.subr.mxu0 %v181
    %213 = vmatpush1.msra.mxu0 %v180
    %214 = vmatprep.subr.mxu0 %v183
    %215 = vmatpush1.msra.mxu0 %v182
    %216 = vmatprep.subr.mxu0 %v185
    %217 = vmatpush1.msra.mxu0 %v184
    %218 = vmatprep.subr.mxu0 %v187
    %219 = vmatpush1.msra.mxu0 %v186
    %220 = vmatprep.subr.mxu0 %v189
    %221 = vmatpush1.msra.mxu0 %v188
    %222 = vmatprep.subr.mxu0 0.0
    %223 = vmatpush1.msra.mxu0 0.0
    %224 = vmatprep.subr.mxu0 0.0
    %225 = vmatpush1.msra.mxu0 0.0
    %226 = vmatprep.subr.mxu0 0.0
    %227 = vmatpush1.msra.mxu0 0.0
    %228 = vmatprep.subr.mxu0 0.0
    %229 = vmatpush1.msra.mxu0 0.0
    %230 = vmatprep.subr.mxu0 0.0
    %231 = vmatpush1.msra.mxu0 0.0
    %232 = vmatprep.subr.mxu0 0.0
    %233 = vmatpush1.msra.mxu0 0.0
    %234 = vmatprep.subr.mxu0 0.0
    %235 = vmatpush1.msra.mxu0 0.0
    %236 = vmatprep.subr.mxu0 0.0
    %237 = vmatpush1.msra.mxu0 0.0
    %238 = vmatprep.subr.mxu0 0.0
    %239 = vmatpush1.msra.mxu0 0.0
    %240 = vmatprep.subr.mxu0 0.0
    %241 = vmatpush1.msra.mxu0 0.0
    %242 = vmatprep.subr.mxu0 0.0
    %243 = vmatpush1.msra.mxu0 0.0
    %244 = vmatprep.subr.mxu0 0.0
    %245 = vmatpush1.msra.mxu0 0.0
    %246 = vmatprep.subr.mxu0 0.0
    %247 = vmatpush1.msra.mxu0 0.0
    %248 = vmatprep.subr.mxu0 0.0
    %249 = vmatpush1.msra.mxu0 0.0
    %250 = vmatprep.subr.mxu0 0.0
    %251 = vmatpush1.msra.mxu0 0.0
    %252 = vmatprep.subr.mxu0 0.0
    %253 = vmatpush1.msra.mxu0 0.0
    %254 = vmatprep.mubr.f32.mxu0 0.0
    %255 = vmatmul.mubr.f32.gmra.mrb[0].mxu0 %v155
    %v256 = vpop.f32.mrb[0].mxu0
    %v257 = vadd.f32 0.0, %v256
    %v258 = vpop.f32.mrb[0].mxu0
    %v259 = vadd.f32 0.0, %v258
    %260 = vdwg.mxu0
    %v261 = vadd.f32 %v54, %v257
    %v262 = vadd.f32 %v55, %v259
    %263 = vst [vmem:[#allocation8] sm:$0xff] %v261
    %264 = vst [vmem:[#allocation8 + $0x8] sm:$0xff] %v262
    // Predicated region
    $region26: #{tpu_custom_call.1} parent=1 // pred_check
      _
    $region27: #{tpu_custom_call.1} parent=1 // pred_check_branch
      %266 = sbr.rel (0) target = $region29
    $region28: #{tpu_custom_call.1} parent=1 // pred_region
      %s268 = ssub.s32 256, 256
      %269 = vsyncadd [#allocation4], %s268
      %s271 = sshll.u32 [#allocation8], 4
      %s272 = int_to_ptr.vmem [resolvable:$true] %s271
      %274 = dma.vmem_to_hbm [thread:$0]  %s272, 256, %s3, [#allocation4]
    $region29: #{tpu_custom_call.1} parent=1 // pred_fallthru
      _
    // Predicated region
    $region30: #{tpu_custom_call.1} parent=1 // pred_check
      _
    $region31: #{tpu_custom_call.1} parent=1 // pred_check_branch
      %276 = sbr.rel (0) target = $region33
    $region32: #{tpu_custom_call.1} parent=1 // pred_region
      %277 = dma.done [#allocation4], 256
    $region33: #{tpu_custom_call.1} parent=1 // pred_fallthru
      _
    %278 = vsyncpa [#allocation3], 1
    %279 = vsyncpa [#allocation6], 1
    %280 = vsyncpa [#allocation4], 1

</llo_original>
